<compile_context>
chip_gen: v7x
topology: tpu7x:2x2x1
jax: 0.10.0
libtpu: 0.0.40
codegen_flags: <defaults>
</compile_context>

<pallas_src>
import functools

import jax
import jax.numpy as jnp
from jax.experimental import pallas as pl
from jax.experimental.pallas import tpu as pltpu


def _round_up(x: int, m: int) -> int:
    return (x + m - 1) // m * m


def _classifier_head_kernel(x_ref, w_ref, b_ref, o_ref, *, compute_dtype):
    x = x_ref[...]
    if x.dtype != compute_dtype:
        # In-kernel VPU cast: no extra HBM traffic, hides under the DMA / MXU.
        x = x.astype(compute_dtype)

    # Linear: logits = x @ W^T + b.  W is pre-transposed to (d_model, n_pad) in the wrapper,
    # so this is a straight MXU matmul with f32 accumulation (no in-kernel transpose).
    logits = jnp.dot(x, w_ref[...], preferred_element_type=jnp.float32)
    logits = logits + b_ref[...]                      # bias is f32, shape (1, n_pad)

    # Numerically stable softmax over the class axis (dim=1).  Padded classes carry a
    # -1e30 bias -> exp underflows to exactly 0, so no probability mass leaks into them.
    # Garbage rows of a partial tail block may go inf/NaN here; their writes are masked.
    m = jnp.max(logits, axis=-1, keepdims=True)
    e = jnp.exp(logits - m)                           # EUP
    # NOTE: if class-axis reductions ever bind (tiny d_model), s could instead be computed
    # as jnp.dot(e, ones((n_pad, 1))) on the otherwise-idle MXU.
    s = jnp.sum(e, axis=-1, keepdims=True)            # XLU
    # Exact normalization for parity with torch.nn.Softmax (approx reciprocal saves nothing
    # on this memory-bound head).
    o_ref[...] = (e / s).astype(o_ref.dtype)


def _vmem_limit_bytes() -> int:
    """~75% of physical VMEM: ~96 MiB on v5e/v6e (128 MiB), ~48 MiB on v7x (64 MiB/TC)."""
    try:
        cap = int(pltpu.get_tpu_info().vmem_capacity_bytes)
        if cap <= 0:
            raise ValueError
    except Exception:
        cap = 64 * 1024 * 1024            # conservative fallback (v7x per-TC size)
    return int(min(cap * 3 // 4, 112 * 1024 * 1024))


def _const_specs(d_model: int, n_pad: int):
    """BlockSpecs for the grid-invariant W^T / bias blocks; single-buffer when supported."""
    w_idx = lambda i: (0, 0)
    b_idx = lambda i: (0, 0)
    if hasattr(pl, "Buffered"):
        try:
            w_spec = pl.BlockSpec((d_model, n_pad), w_idx, pipeline_mode=pl.Buffered(1))
            b_spec = pl.BlockSpec((1, n_pad), b_idx, pipeline_mode=pl.Buffered(1))
            return w_spec, b_spec, 1
        except Exception:
            pass
    return pl.BlockSpec((d_model, n_pad), w_idx), pl.BlockSpec((1, n_pad), b_idx), 2


def _default_batch_tile(B, d_model, n_pad, x_dtype, compute_dtype, out_dtype,
                        vmem_limit, w_buffers):
    """Largest VMEM-fitting, MXU/sublane-aligned batch tile (generation-aware)."""
    x_b = jnp.dtype(x_dtype).itemsize
    c_b = jnp.dtype(compute_dtype).itemsize
    o_b = jnp.dtype(out_dtype).itemsize

    # Sub-32-bit tiles pack 2+ rows per sublane -> use a 16-row quantum for bf16 paths.
    sub = 16 if min(x_b, c_b, o_b) < 4 else 8

    # Grid-invariant VMEM: W^T + bias (x2 if single-buffering is unavailable).
    fixed = w_buffers * (d_model * n_pad * c_b + n_pad * 4)
    # Per-batch-row VMEM: double-buffered x & out tiles, f32 logits + exp intermediates,
    # and the compute-dtype copy of the x tile made inside the kernel.
    per_row = 2 * d_model * x_b + 2 * n_pad * o_b + 2 * n_pad * 4 + d_model * c_b

    budget = int(0.8 * vmem_limit) - fixed    # 20% headroom for Mosaic-internal scratch
    bt = budget // per_row if budget > 0 else sub

    # MXU-friendly M alignment: 256-aligned for large tiles (v6e/v7x 2x256^2 MXUs; also a
    # multiple of v5e's 128), 128 for medium, sublane quantum for small.
    if bt >= 1024:
        bt = 1024
    elif bt >= 256:
        bt = (bt // 256) * 256
    elif bt >= 128:
        bt = 128
    else:
        bt = max(sub, (bt // sub) * sub)

    # Never tile beyond the (sublane-rounded) batch itself.
    bt = min(bt, _round_up(max(B, 1), sub))
    # Keep >=2 grid steps when there is enough work: enables double-buffer overlap and lets
    # v7x shard the "parallel" batch axis across its 2 TensorCores.
    if B >= 2 * sub and bt >= B:
        bt = max(sub, _round_up(pl.cdiv(B, 2), sub))
    return int(bt)


@functools.partial(jax.jit, static_argnames=("batch_tile", "compute_dtype", "out_dtype"))
def classifier_head(x, w, b, *, batch_tile=None, compute_dtype=jnp.bfloat16, out_dtype=None):
    """x: (B, d_model), w: (num_classes, d_model), b: (num_classes,) -> (B, num_classes).

    compute_dtype: matmul input dtype (f32 MXU accumulation + f32 softmax regardless).
                   Pass jnp.float32 for closest parity with the f32 PyTorch head.
    out_dtype:     output dtype (default x.dtype). bf16 halves the dominant output HBM stream.
    """
    B, d_model = x.shape
    num_classes, d_model_w = w.shape
    assert d_model_w == d_model
    compute_dtype = jnp.dtype(compute_dtype)
    out_dtype = x.dtype if out_dtype is None else jnp.dtype(out_dtype)

    # Lane-dense class axis: pad num_classes up to a multiple of 128 (unmasked vst).
    n_pad = _round_up(num_classes, 128)

    w_spec, b_spec, w_buffers = _const_specs(d_model, n_pad)
    vmem_limit = _vmem_limit_bytes()

    if batch_tile is None:
        batch_tile = _default_batch_tile(B, d_model, n_pad, x.dtype, compute_dtype,
                                         out_dtype, vmem_limit, w_buffers)
    batch_tile = int(batch_tile)

    # Parameter prep (once per call under jit; in a real model this is done at load time).
    w_t = w.T.astype(compute_dtype)                       # (d_model, num_classes)
    b_p = b.astype(jnp.float32).reshape(1, num_classes)   # (1, num_classes)
    if n_pad != num_classes:
        w_t = jnp.pad(w_t, ((0, 0), (0, n_pad - num_classes)))
        b_p = jnp.pad(b_p, ((0, 0), (0, n_pad - num_classes)), constant_values=-1e30)

    grid = (pl.cdiv(B, batch_tile),)   # partial tail block handled by Pallas masking

    out = pl.pallas_call(
        functools.partial(_classifier_head_kernel, compute_dtype=compute_dtype),
        out_shape=jax.ShapeDtypeStruct((B, n_pad), out_dtype),
        grid_spec=pltpu.PrefetchScalarGridSpec(
            num_scalar_prefetch=0,
            grid=grid,
            in_specs=[
                pl.BlockSpec((batch_tile, d_model), lambda i: (i, 0)),  # x tile (pipelined)
                w_spec,   # W^T, grid-invariant (single-buffered when supported)
                b_spec,   # bias, grid-invariant
            ],
            out_specs=pl.BlockSpec((batch_tile, n_pad), lambda i: (i, 0)),
        ),
        compiler_params=pltpu.CompilerParams(
            dimension_semantics=("parallel",),    # batch axis -> v7x megacore sharding
            vmem_limit_bytes=vmem_limit,
        ),
    )(x, w_t, b_p)

    # Slice away only the class padding (batch is never padded anymore).
    if n_pad != num_classes:
        out = out[:, :num_classes]
    return out


def _reference(x, w, b):
    logits = x.astype(jnp.float32) @ w.astype(jnp.float32).T + b.astype(jnp.float32)
    return jax.nn.softmax(logits, axis=1)


if __name__ == "__main__":
    # Small shapes consistent with the module: d_model=32, n_cxt=8 (unused in forward),
    # num_classes=16, batch=8.
    d_model, n_cxt, num_classes = 32, 8, 16
    batch = 8

    key = jax.random.PRNGKey(0)
    kx, kw, kb, kx2 = jax.random.split(key, 4)

    # Deterministic init (mimics nn.Linear default U(-1/sqrt(fan_in), 1/sqrt(fan_in))).
    bound = 1.0 / jnp.sqrt(jnp.float32(d_model))
    w = jax.random.uniform(kw, (num_classes, d_model), jnp.float32, -bound, bound)
    b = jax.random.uniform(kb, (num_classes,), jnp.float32, -bound, bound)
    x = jax.random.normal(kx, (batch, d_model), jnp.float32)

    ref = _reference(x, w, b)

    # Default path: bf16 MXU inputs (cast in-kernel), f32 accumulation + f32 softmax.
    out = jax.block_until_ready(classifier_head(x, w, b))
    assert out.shape == (batch, num_classes) and out.dtype == x.dtype
    assert jnp.allclose(out, ref, atol=2e-2, rtol=2e-2)
    assert jnp.allclose(jnp.sum(out, axis=1), jnp.ones((batch,)), atol=1e-4)

    # f32 compute path (tighter numerical parity with the PyTorch head).
    out_f32 = jax.block_until_ready(classifier_head(x, w, b, compute_dtype=jnp.float32))
    assert jnp.allclose(out_f32, ref, atol=2e-3, rtol=2e-3)

    # bf16 output path (halves the output writeback stream).
    out_bf16 = jax.block_until_ready(classifier_head(x, w, b, out_dtype=jnp.bfloat16))
    assert out_bf16.dtype == jnp.bfloat16
    assert jnp.allclose(out_bf16.astype(jnp.float32), ref, atol=2e-2, rtol=2e-2)

    # Ragged batch + explicit small tile: exercises the cdiv grid with a masked tail block
    # and a multi-step (pipelined) grid.
    x2 = jax.random.normal(kx2, (10, d_model), jnp.float32)
    out2 = jax.block_until_ready(
        classifier_head(x2, w, b, batch_tile=8, compute_dtype=jnp.float32))
    assert out2.shape == (10, num_classes)
    assert jnp.allclose(out2, _reference(x2, w, b), atol=2e-3, rtol=2e-3)

    print("KERNEL_OK")
</pallas_src>

<mosaic_0001>
module attributes {stable_mosaic.version = 11 : i64} {
  func.func @_classifier_head_kernel(%arg0: i32, %arg1: memref<16x32xf32, #tpu.memory_space<vmem>>, %arg2: memref<32x128xbf16, #tpu.memory_space<vmem>>, %arg3: memref<1x128xf32, #tpu.memory_space<vmem>>, %arg4: memref<16x128xf32, #tpu.memory_space<vmem>>) attributes {dimension_semantics = [#tpu.dimension_semantics<parallel>], iteration_bounds = array<i64: 1>, scalar_prefetch = 0 : i64, scratch_operands = 0 : i64, tpu.core_type = #tpu.core_type<tc>, window_params = [{transform_indices = @transform_0, window_bounds = array<i64: 16, 32>}, {pipeline_mode = #tpu.pipeline_mode<synchronous>, transform_indices = @transform_1, window_bounds = array<i64: 32, 128>}, {pipeline_mode = #tpu.pipeline_mode<synchronous>, transform_indices = @transform_2, window_bounds = array<i64: 1, 128>}, {transform_indices = @transform_3, window_bounds = array<i64: 16, 128>}]} {
    %c0 = arith.constant 0 : index
    %c0_0 = arith.constant 0 : index
    %0 = vector.load %arg1[%c0, %c0_0] : memref<16x32xf32, #tpu.memory_space<vmem>>, vector<16x32xf32>
    %1 = arith.truncf %0 : vector<16x32xf32> to vector<16x32xbf16>
    %c0_1 = arith.constant 0 : index
    %c0_2 = arith.constant 0 : index
    %2 = vector.load %arg2[%c0_1, %c0_2] : memref<32x128xbf16, #tpu.memory_space<vmem>>, vector<32x128xbf16>
    %cst = arith.constant dense<0.000000e+00> : vector<16x128xf32>
    %3 = tpu.matmul %1, %2, %cst {dimension_numbers = #tpu.dot_dimension_numbers<[1], [0], [0], [1], [0, 0, 1, 1], [], []>} : vector<16x32xbf16>, vector<32x128xbf16>, vector<16x128xf32> -> vector<16x128xf32>
    %c0_3 = arith.constant 0 : index
    %c0_4 = arith.constant 0 : index
    %4 = vector.load %arg3[%c0_3, %c0_4] : memref<1x128xf32, #tpu.memory_space<vmem>>, vector<1x128xf32>
    %5 = vector.broadcast %4 : vector<1x128xf32> to vector<16x128xf32>
    %6 = arith.addf %3, %5 : vector<16x128xf32>
    %cst_5 = arith.constant dense<0xFF800000> : vector<16xf32>
    %7 = vector.multi_reduction <maximumf>, %6, %cst_5 [1] : vector<16x128xf32> to vector<16xf32>
    %8 = vector.shape_cast %7 : vector<16xf32> to vector<16x1xf32>
    %9 = vector.broadcast %8 : vector<16x1xf32> to vector<16x128xf32>
    %10 = arith.subf %6, %9 : vector<16x128xf32>
    %11 = math.exp %10 : vector<16x128xf32>
    %cst_6 = arith.constant dense<0.000000e+00> : vector<16xf32>
    %12 = vector.multi_reduction <add>, %11, %cst_6 [1] : vector<16x128xf32> to vector<16xf32>
    %13 = vector.shape_cast %12 : vector<16xf32> to vector<16x1xf32>
    %14 = vector.broadcast %13 : vector<16x1xf32> to vector<16x128xf32>
    %15 = arith.divf %11, %14 : vector<16x128xf32>
    %c0_7 = arith.constant 0 : index
    %c0_8 = arith.constant 0 : index
    %16 = vector.load %arg4[%c0_7, %c0_8] : memref<16x128xf32, #tpu.memory_space<vmem>>, vector<16x128xf32>
    tpu.vector_store %arg4[%c0_7, %c0_8], %15 {strides = array<i32>} : memref<16x128xf32, #tpu.memory_space<vmem>>, vector<16x128xf32>,
    return
  }
  func.func @transform_0(%arg0: i32) -> (i32, i32) {
    %c0_i32 = arith.constant 0 : i32
    %c0_i32_0 = arith.constant 0 : i32
    return %arg0, %c0_i32 : i32, i32
  }
  func.func @transform_1(%arg0: i32) -> (i32, i32) {
    %c0_i32 = arith.constant 0 : i32
    %c0_i32_0 = arith.constant 0 : i32
    %c0_i32_1 = arith.constant 0 : i32
    return %c0_i32, %c0_i32_0 : i32, i32
  }
  func.func @transform_2(%arg0: i32) -> (i32, i32) {
    %c0_i32 = arith.constant 0 : i32
    %c0_i32_0 = arith.constant 0 : i32
    %c0_i32_1 = arith.constant 0 : i32
    return %c0_i32, %c0_i32_0 : i32, i32
  }
  func.func @transform_3(%arg0: i32) -> (i32, i32) {
    %c0_i32 = arith.constant 0 : i32
    %c0_i32_0 = arith.constant 0 : i32
    return %arg0, %c0_i32 : i32, i32
  }
}

</mosaic_0001>

<llo_original>
// kernel: classifier_head.1
$region0: #{classifier_head.1}
  #allocation0 [shape = 'u32[]', space=smem, size = 0x4, offset = 0x4, fixed_abs, tag = 'smem constant byte address 0x4 - core index']
  #allocation1 [shape = 'u32[144,128]{1,0:T(1,128)}', space=vmem, size = 0x12000, scoped, tag = 'internal scratch']
  %s0 = inlined_call_operand.vmem [shape: f32[8,32], index: 0, kind: input, shape index: {}]
  %s1 = inlined_call_operand.vmem [shape: bf16[32,128], index: 1, kind: input, shape index: {}]
  %s2 = inlined_call_operand.vmem [shape: f32[1,128], index: 2, kind: input, shape index: {}]
  %s3 = inlined_call_operand.hbm [shape: f32[8,128], index: 3, kind: output, shape index: {}]
  %s4 = sld [smem:[#allocation0]]
  $region22: #{classifier_head.1} parent=0
    _
  %s6 = ssub.s32 1, %s4
  %s7 = scalar_select 0, %s6, %s4
  $region1: #{classifier_head.1} parent=0
    #allocation2 [shape = 'u8[8192]{0}', space=vmem, size = 0x2000, scoped, tag = 'output window, operand 0, single buffered']
    #allocation3 [shape = 's32[1]{0}', space=sflag, size = 0x4, scoped, tag = 'scoped memory for classifier_head.1']
    %8 = vsyncpa [#allocation3], 0
    // Predicated region
    $region2: #{classifier_head.1} parent=1 // pred_check
      _
    $region3: #{classifier_head.1} parent=1 // pred_check_branch
      %10 = sbr.rel (0) target = $region5
    $region4: #{classifier_head.1} parent=1 // pred_region
      _
    $region5: #{classifier_head.1} parent=1 // pred_fallthru
      _
    // Predicated region
    $region6: #{classifier_head.1} parent=1 // pred_check
      _
    $region7: #{classifier_head.1} parent=1 // pred_check_branch
      %12 = sbr.rel (0) target = $region9
    $region8: #{classifier_head.1} parent=1 // pred_region
      _
    $region9: #{classifier_head.1} parent=1 // pred_fallthru
      _
    // Predicated region
    $region10: #{classifier_head.1} parent=1 // pred_check
      _
    $region11: #{classifier_head.1} parent=1 // pred_check_branch
      %14 = sbr.rel (0) target = $region13
    $region12: #{classifier_head.1} parent=1 // pred_region
      _
    $region13: #{classifier_head.1} parent=1 // pred_fallthru
      _
    %v16 = vld [vmem:[%s0] sm:$0xff]
    %v17 = vld [vmem:[%s0 + $0x8] sm:$0xff]
    %v18 = vpack.c.bf16 %v17, %v16
    %v19 = vld [vmem:[%s1] sm:$0xf]
    %v20 = vld [vmem:[%s1 + $0x4] sm:$0xf]
    %v21 = vld [vmem:[%s1 + $0x8] sm:$0xf]
    %v22 = vld [vmem:[%s1 + $0xc] sm:$0xf]
    %v23 = vld [vmem:[%s2] sm:$0x1]
    %v25 = vlaneseq
    %v26 = vshrl.u32 %v25, 7
    %v27 = vsub.s32 0, %v26
    %v28 = vrot.slane %v23, %v27
    %v34 = vunpack.c.l.b16 %v19
    %v35 = vunpack.c.l.b16 %v20
    %v36 = vunpack.c.l.b16 %v21
    %v37 = vunpack.c.l.b16 %v22
    %v38 = vpack.c.b16 %v35, %v34
    %v39 = vpack.c.b16 %v37, %v36
    %vm42 = vcmask 261120
    %v44 = vsel %vm42, %v18, 0
    %46 = vmatprep.subr.bf16.mxu0 0
    %47 = vmatpush1.bf16.msra.mxu0 %v38
    %48 = vmatprep.subr.bf16.mxu0 0
    %49 = vmatpush1.bf16.msra.mxu0 %v39
    %50 = vmatprep.subr.bf16.mxu0 0
    %51 = vmatpush1.bf16.msra.mxu0 0
    %52 = vmatprep.subr.bf16.mxu0 0
    %53 = vmatpush1.bf16.msra.mxu0 0
    %54 = vmatprep.subr.bf16.mxu0 0
    %55 = vmatpush1.bf16.msra.mxu0 0
    %56 = vmatprep.subr.bf16.mxu0 0
    %57 = vmatpush1.bf16.msra.mxu0 0
    %58 = vmatprep.subr.bf16.mxu0 0
    %59 = vmatpush1.bf16.msra.mxu0 0
    %60 = vmatprep.subr.bf16.mxu0 0
    %61 = vmatpush1.bf16.msra.mxu0 0
    %62 = vmatprep.subr.bf16.mxu0 0
    %63 = vmatpush1.bf16.msra.mxu0 0
    %64 = vmatprep.subr.bf16.mxu0 0
    %65 = vmatpush1.bf16.msra.mxu0 0
    %66 = vmatprep.subr.bf16.mxu0 0
    %67 = vmatpush1.bf16.msra.mxu0 0
    %68 = vmatprep.subr.bf16.mxu0 0
    %69 = vmatpush1.bf16.msra.mxu0 0
    %70 = vmatprep.subr.bf16.mxu0 0
    %71 = vmatpush1.bf16.msra.mxu0 0
    %72 = vmatprep.subr.bf16.mxu0 0
    %73 = vmatpush1.bf16.msra.mxu0 0
    %74 = vmatprep.subr.bf16.mxu0 0
    %75 = vmatpush1.bf16.msra.mxu0 0
    %76 = vmatprep.subr.bf16.mxu0 0
    %77 = vmatpush1.bf16.msra.mxu0 0
    %78 = vmatprep.mubr.bf16.mxu0 0
    %79 = vmatmul.mubr.bf16.gmra.mrb[0].mxu0 %v44
    %v80 = vpop.f32.mrb[0].mxu0
    %v81 = vadd.f32 %v28, %v80
    %v82 = vpop.f32.mrb[0].mxu0
    %v83 = vpop.f32.mrb[0].mxu0
    %v84 = vadd.f32 %v28, %v83
    %v85 = vpop.f32.mrb[0].mxu0
    %86 = vdwg.mxu0
    %87 = vmax.xlane.f32.xlu0 %v81
    %v88 = vpop.xlane.xlu0 %87
    %89 = vmax.xlane.f32.xlu0 %v84
    %v90 = vpop.xlane.xlu0 %89
    %v91 = vsub.f32 %v81, %v88
    %v92 = vsub.f32 %v84, %v90
    %v93 = vmul.f32 %v91, 1.442695
    %v94 = vpow.pop %v93
    %v95 = vmul.f32 %v92, 1.442695
    %v96 = vpow.pop %v95
    %97 = vadd.xlane.f32.xlu0 %v94
    %v98 = vpop.xlane.xlu0 %97
    %99 = vadd.xlane.f32.xlu0 %v96
    %v100 = vpop.xlane.xlu0 %99
    %v101 = vrcp.pop %v98
    %v102 = vmul.f32 %v94, %v101
    %v103 = vrcp.pop %v100
    %v104 = vmul.f32 %v96, %v103
    %105 = vst [vmem:[#allocation2] sm:$0xff] %v102
    %106 = vst [vmem:[#allocation2 + $0x8] sm:$0xff] %v104
    // Predicated region
    $region14: #{classifier_head.1} parent=1 // pred_check
      _
    $region15: #{classifier_head.1} parent=1 // pred_check_branch
      %108 = sbr.rel (0) target = $region17
    $region16: #{classifier_head.1} parent=1 // pred_region
      %s110 = ssub.s32 256, 128
      %111 = vsyncadd [#allocation3], %s110
      %s112 = sshll.u32 [#allocation2], 4
      %s113 = int_to_ptr.vmem [resolvable:$true] %s112
      %118 = dma.vmem_to_hbm [thread:$0]  %s113, 128, %s3, [#allocation3], 128, 128, 8
    $region17: #{classifier_head.1} parent=1 // pred_fallthru
      _
    // Predicated region
    $region18: #{classifier_head.1} parent=1 // pred_check
      _
    $region19: #{classifier_head.1} parent=1 // pred_check_branch
      %120 = sbr.rel (0) target = $region21
    $region20: #{classifier_head.1} parent=1 // pred_region
      %121 = dma.done [#allocation3], 256
    $region21: #{classifier_head.1} parent=1 // pred_fallthru
      _
    %122 = vsyncpa [#allocation3], 1

</llo_original>
